<compile_context>
chip_gen: v7x
topology: tpu7x:2x2x1
jax: 0.10.0
libtpu: 0.0.40
codegen_flags: <defaults>
</compile_context>

<pallas_src>
import math
from functools import partial

import jax
import jax.numpy as jnp
from jax.experimental import pallas as pl
from jax.experimental.pallas import tpu as pltpu

# ---------------------------------------------------------------------------
# Problem sizes (small, consistent with a Linear layer)
# ---------------------------------------------------------------------------
N_IN = 32            # input features
N_OUT = 16           # output features
N_TRANSFORMS = 4     # number of normalizing-flow transformations
BATCH = 8            # batch size
USE_BIAS = True
SCALED_VARIANCE = True


# ---------------------------------------------------------------------------
# Normalizing-flow weight sampler (plain JAX "glue": parameter setup/sampling)
# ---------------------------------------------------------------------------
def init_flow_params(key, dim, n_transforms):
    """Deterministic planar-flow parameters: list of (u, w, b)."""
    params = []
    for t in range(n_transforms):
        ku, kw, kb = jax.random.split(jax.random.fold_in(key, t), 3)
        u = 0.1 * jax.random.normal(ku, (dim,), dtype=jnp.float32)
        w = 0.1 * jax.random.normal(kw, (dim,), dtype=jnp.float32)
        b = 0.1 * jax.random.normal(kb, (), dtype=jnp.float32)
        params.append((u, w, b))
    return params


def sample_weights(key, params, n_samples, n_rows, n_cols):
    """Sample [n_samples, n_rows, n_cols] weights through planar flows."""
    dim = n_rows * n_cols
    z = jax.random.normal(key, (n_samples, dim), dtype=jnp.float32)
    for (u, w, b) in params:
        # u-hat reparameterization (guarantees invertibility of each flow).
        wu = jnp.dot(w, u)
        u_hat = u + (jax.nn.softplus(wu) - 1.0 - wu) * w / jnp.dot(w, w)
        a = z @ w + b                                      # [n_samples]
        z = z + u_hat[None, :] * jnp.tanh(a)[:, None]      # planar transform
    return z.reshape(n_samples, n_rows, n_cols)


# ---------------------------------------------------------------------------
# Pallas kernel: acc = (X * scale) @ W_flat + bias ; per-sample stores
# ---------------------------------------------------------------------------
def _nflows_linear_kernel(x_ref, w_ref, b_ref, o_ref, *, scale, n_samples,
                          n_out):
    # x_ref: [block_b, n_in]        (raw input tile)
    # w_ref: [n_in, S*n_out]        (resident; sample s in lanes [s*n_out, ...))
    # b_ref: [1, S*n_out]           (resident bias slab, row 0 of each sample)
    # o_ref: [S, block_b, n_out]    (module output layout, written directly)
    x = x_ref[...]
    if scale != 1.0:                      # static (trace-time) branch
        x = x * jnp.asarray(scale, x.dtype)
    acc = jnp.dot(x, w_ref[...], preferred_element_type=jnp.float32)
    acc = acc + b_ref[...]                # VPU broadcast-add over batch rows
    # Statically-unrolled per-sample stores -> [S, block_b, n_out] layout,
    # avoiding a wrapper-side XLA transpose of the (largest) output tensor.
    for s in range(n_samples):
        o_ref[s, :, :] = acc[:, s * n_out:(s + 1) * n_out].astype(o_ref.dtype)


def _choose_block_b(B):
    """Batch tile: >=2 grid points when possible (v7x megacore), ~512 rows max."""
    if B <= 8 or B % 8 != 0:
        return B
    for tb in (512, 256, 128, 64, 32, 16, 8):
        if tb < B and B % tb == 0:
            return tb
    return B


def nflows_linear_sample_predict(X, W_samples, *, scaled_variance=True,
                                 use_bias=True, block_b=None):
    """Forward pass through sampled weights.

    Args:
      X: [batch, n_in] float32
      W_samples: [n_samples, n_in + 1, n_out] float32 (row 0 = bias row) when
        use_bias, else [n_samples, n_in, n_out].

    Returns:
      [n_samples, batch, n_out] float32, matching the module.
    """
    B, n_in = X.shape
    S, n_rows, n_out = W_samples.shape

    # Tiny W/bias reshapes (S*(n_in+1)*n_out elements) stay in the wrapper.
    if use_bias:
        assert n_rows == n_in + 1, "expected bias row at index 0"
        w_flat = jnp.transpose(W_samples[:, 1:, :], (1, 0, 2)).reshape(
            n_in, S * n_out)
        b_flat = jnp.transpose(W_samples[:, :1, :], (1, 0, 2)).reshape(
            1, S * n_out)
    else:
        assert n_rows == n_in
        w_flat = jnp.transpose(W_samples, (1, 0, 2)).reshape(n_in, S * n_out)
        b_flat = jnp.zeros((1, S * n_out), X.dtype)

    scale = (1.0 / math.sqrt(n_in)) if scaled_variance else 1.0

    if block_b is None:
        block_b = _choose_block_b(B)
    assert B % block_b == 0 and (block_b % 8 == 0 or block_b == B)

    kernel = partial(_nflows_linear_kernel, scale=scale, n_samples=S,
                     n_out=n_out)

    itemsize = jnp.dtype(X.dtype).itemsize
    flops = 2 * B * n_in * S * n_out + B * S * n_out
    bytes_accessed = (B * n_in + n_in * S * n_out + S * n_out
                      + S * B * n_out) * itemsize

    # NOTE: operands could be cast to bfloat16 on v6e/v7x (keep f32
    # accumulation via preferred_element_type) for ~2x HBM saving; kept f32
    # here to preserve the 1e-5 reference tolerance.
    out = pl.pallas_call(
        kernel,
        out_shape=jax.ShapeDtypeStruct((S, B, n_out), X.dtype),
        grid_spec=pl.GridSpec(
            grid=(B // block_b,),
            in_specs=[
                pl.BlockSpec((block_b, n_in), lambda i: (i, 0)),
                pl.BlockSpec((n_in, S * n_out), lambda i: (0, 0)),   # resident
                pl.BlockSpec((1, S * n_out), lambda i: (0, 0)),      # resident
            ],
            out_specs=pl.BlockSpec((S, block_b, n_out), lambda i: (0, i, 0)),
        ),
        compiler_params=pltpu.CompilerParams(
            dimension_semantics=("parallel",)),
        cost_estimate=pl.CostEstimate(flops=flops, transcendentals=0,
                                      bytes_accessed=bytes_accessed),
    )(X, w_flat, b_flat)
    return out


def nflows_linear_forward(X, W_sample_1):
    """Module forward(): sample_predict with n_samples = 1."""
    # NOTE: S=1 gives a 16-lane accumulator; for throughput, draw samples in
    # groups of 8 (S*n_out = 128 lanes) as done in the batched path below.
    return nflows_linear_sample_predict(X, W_sample_1,
                                        scaled_variance=SCALED_VARIANCE,
                                        use_bias=USE_BIAS)


# ---------------------------------------------------------------------------
# Main
# ---------------------------------------------------------------------------
if __name__ == "__main__":
    key = jax.random.PRNGKey(0)
    k_x, k_init, k_s1, k_s8, k_xl, k_sl = jax.random.split(key, 6)

    # Input data [batch, n_in]
    X = jax.random.normal(k_x, (BATCH, N_IN), dtype=jnp.float32)

    # Flow over (n_in + 1) x n_out weight matrix (extra row = bias).
    n_rows = N_IN + (1 if USE_BIAS else 0)
    flow_params = init_flow_params(k_init, n_rows * N_OUT, N_TRANSFORMS)

    # --- (a) module forward(): n_samples = 1 --------------------------------
    W1 = sample_weights(k_s1, flow_params, 1, n_rows, N_OUT)    # [1, 33, 16]
    out1 = jax.block_until_ready(nflows_linear_forward(X, W1))
    ref1 = (jnp.einsum('bi,sio->sbo', X / math.sqrt(N_IN), W1[:, 1:, :])
            + W1[:, :1, :])
    assert out1.shape == (1, BATCH, N_OUT)
    assert jnp.allclose(out1, ref1, atol=1e-5, rtol=1e-5), "forward mismatch"

    # --- (b) batched samples: S * n_out = 128 -> lane-dense accumulator -----
    S = 8
    W8 = sample_weights(k_s8, flow_params, S, n_rows, N_OUT)    # [8, 33, 16]
    out8 = jax.block_until_ready(
        nflows_linear_sample_predict(X, W8, scaled_variance=SCALED_VARIANCE,
                                     use_bias=USE_BIAS))
    ref8 = (jnp.einsum('bi,sio->sbo', X / math.sqrt(N_IN), W8[:, 1:, :])
            + W8[:, :1, :])
    assert out8.shape == (S, BATCH, N_OUT)
    assert jnp.allclose(out8, ref8, atol=1e-5, rtol=1e-5), "batched mismatch"

    # --- (c) larger batch -> multi-point 'parallel' grid (block_b auto) -----
    B_LARGE = 64
    XL = jax.random.normal(k_xl, (B_LARGE, N_IN), dtype=jnp.float32)
    WL = sample_weights(k_sl, flow_params, S, n_rows, N_OUT)
    outL = jax.block_until_ready(
        nflows_linear_sample_predict(XL, WL, scaled_variance=SCALED_VARIANCE,
                                     use_bias=USE_BIAS))
    refL = (jnp.einsum('bi,sio->sbo', XL / math.sqrt(N_IN), WL[:, 1:, :])
            + WL[:, :1, :])
    assert outL.shape == (S, B_LARGE, N_OUT)
    assert jnp.allclose(outL, refL, atol=1e-5, rtol=1e-5), "tiled mismatch"

    print("KERNEL_OK")
</pallas_src>

<mosaic_0001>
module attributes {stable_mosaic.version = 11 : i64} {
  func.func @_nflows_linear_kernel(%arg0: i32, %arg1: memref<8x32xf32, #tpu.memory_space<vmem>>, %arg2: memref<32x16xf32, #tpu.memory_space<vmem>>, %arg3: memref<1x16xf32, #tpu.memory_space<vmem>>, %arg4: memref<1x8x16xf32, #tpu.memory_space<vmem>>) attributes {dimension_semantics = [#tpu.dimension_semantics<parallel>], iteration_bounds = array<i64: 1>, scalar_prefetch = 0 : i64, scratch_operands = 0 : i64, tpu.core_type = #tpu.core_type<tc>, window_params = [{transform_indices = @transform_0, window_bounds = array<i64: 8, 32>}, {pipeline_mode = #tpu.pipeline_mode<synchronous>, transform_indices = @transform_1, window_bounds = array<i64: 32, 16>}, {pipeline_mode = #tpu.pipeline_mode<synchronous>, transform_indices = @transform_2, window_bounds = array<i64: 1, 16>}, {transform_indices = @transform_3, window_bounds = array<i64: 1, 8, 16>}]} {
    %c0 = arith.constant 0 : index
    %c0_0 = arith.constant 0 : index
    %0 = vector.load %arg1[%c0, %c0_0] : memref<8x32xf32, #tpu.memory_space<vmem>>, vector<8x32xf32>
    %cst = arith.constant 0.176776692 : f32
    %1 = vector.broadcast %cst : f32 to vector<8x32xf32>
    %2 = arith.mulf %0, %1 : vector<8x32xf32>
    %c0_1 = arith.constant 0 : index
    %c0_2 = arith.constant 0 : index
    %3 = vector.load %arg2[%c0_1, %c0_2] : memref<32x16xf32, #tpu.memory_space<vmem>>, vector<32x16xf32>
    %cst_3 = arith.constant dense<0.000000e+00> : vector<8x16xf32>
    %4 = tpu.matmul %2, %3, %cst_3 {dimension_numbers = #tpu.dot_dimension_numbers<[1], [0], [0], [1], [0, 0, 1, 1], [], []>} : vector<8x32xf32>, vector<32x16xf32>, vector<8x16xf32> -> vector<8x16xf32>
    %c0_4 = arith.constant 0 : index
    %c0_5 = arith.constant 0 : index
    %5 = vector.load %arg3[%c0_4, %c0_5] : memref<1x16xf32, #tpu.memory_space<vmem>>, vector<1x16xf32>
    %6 = vector.broadcast %5 : vector<1x16xf32> to vector<8x16xf32>
    %7 = arith.addf %4, %6 : vector<8x16xf32>
    %c0_6 = arith.constant 0 : index
    %c0_7 = arith.constant 0 : index
    %c0_8 = arith.constant 0 : index
    %8 = vector.load %arg4[%c0_6, %c0_7, %c0_8] : memref<1x8x16xf32, #tpu.memory_space<vmem>>, vector<1x8x16xf32>
    %9 = vector.shape_cast %8 : vector<1x8x16xf32> to vector<8x16xf32>
    %10 = vector.shape_cast %7 : vector<8x16xf32> to vector<1x8x16xf32>
    tpu.vector_store %arg4[%c0_6, %c0_7, %c0_8], %10 {strides = array<i32>} : memref<1x8x16xf32, #tpu.memory_space<vmem>>, vector<1x8x16xf32>,
    return
  }
  func.func @transform_0(%arg0: i32) -> (i32, i32) {
    %c0_i32 = arith.constant 0 : i32
    %c0_i32_0 = arith.constant 0 : i32
    return %arg0, %c0_i32 : i32, i32
  }
  func.func @transform_1(%arg0: i32) -> (i32, i32) {
    %c0_i32 = arith.constant 0 : i32
    %c0_i32_0 = arith.constant 0 : i32
    %c0_i32_1 = arith.constant 0 : i32
    return %c0_i32, %c0_i32_0 : i32, i32
  }
  func.func @transform_2(%arg0: i32) -> (i32, i32) {
    %c0_i32 = arith.constant 0 : i32
    %c0_i32_0 = arith.constant 0 : i32
    %c0_i32_1 = arith.constant 0 : i32
    return %c0_i32, %c0_i32_0 : i32, i32
  }
  func.func @transform_3(%arg0: i32) -> (i32, i32, i32) {
    %c0_i32 = arith.constant 0 : i32
    %c0_i32_0 = arith.constant 0 : i32
    %c0_i32_1 = arith.constant 0 : i32
    return %c0_i32, %arg0, %c0_i32_0 : i32, i32, i32
  }
}

</mosaic_0001>

<llo_original>
// kernel: tpu_custom_call.1
$region0: #{tpu_custom_call.1}
  #allocation0 [shape = 'u32[]', space=smem, size = 0x4, offset = 0x4, fixed_abs, tag = 'smem constant byte address 0x4 - core index']
  #allocation1 [shape = 'u32[144,128]{1,0:T(1,128)}', space=vmem, size = 0x12000, scoped, tag = 'internal scratch']
  %s0 = inlined_call_operand.vmem [shape: f32[8,32], index: 0, kind: input, shape index: {}]
  %s1 = inlined_call_operand.vmem [shape: f32[32,16], index: 1, kind: input, shape index: {}]
  %s2 = inlined_call_operand.vmem [shape: f32[1,16], index: 2, kind: input, shape index: {}]
  %s3 = inlined_call_operand.hbm [shape: f32[1,8,16], index: 3, kind: output, shape index: {}]
  %s4 = sld [smem:[#allocation0]]
  $region22: #{tpu_custom_call.1} parent=0
    _
  %s6 = ssub.s32 1, %s4
  %s7 = scalar_select 0, %s6, %s4
  $region1: #{tpu_custom_call.1} parent=0
    #allocation2 [shape = 'u8[4096]{0}', space=vmem, size = 0x1000, scoped, tag = 'output window, operand 0, single buffered']
    #allocation3 [shape = 's32[1]{0}', space=sflag, size = 0x4, scoped, tag = 'scoped memory for tpu_custom_call.1']
    %8 = vsyncpa [#allocation3], 0
    // Predicated region
    $region2: #{tpu_custom_call.1} parent=1 // pred_check
      _
    $region3: #{tpu_custom_call.1} parent=1 // pred_check_branch
      %10 = sbr.rel (0) target = $region5
    $region4: #{tpu_custom_call.1} parent=1 // pred_region
      _
    $region5: #{tpu_custom_call.1} parent=1 // pred_fallthru
      _
    // Predicated region
    $region6: #{tpu_custom_call.1} parent=1 // pred_check
      _
    $region7: #{tpu_custom_call.1} parent=1 // pred_check_branch
      %12 = sbr.rel (0) target = $region9
    $region8: #{tpu_custom_call.1} parent=1 // pred_region
      _
    $region9: #{tpu_custom_call.1} parent=1 // pred_fallthru
      _
    // Predicated region
    $region10: #{tpu_custom_call.1} parent=1 // pred_check
      _
    $region11: #{tpu_custom_call.1} parent=1 // pred_check_branch
      %14 = sbr.rel (0) target = $region13
    $region12: #{tpu_custom_call.1} parent=1 // pred_region
      _
    $region13: #{tpu_custom_call.1} parent=1 // pred_fallthru
      _
    %v15 = vld [vmem:[%s0] sm:$0xff]
    %v16 = vmul.f32 %v15, 0.17677669
    %v17 = vld [vmem:[%s1] sm:$0xff]
    %v18 = vld [vmem:[%s1 + $0x8] sm:$0xff]
    %v19 = vld [vmem:[%s1 + $0x10] sm:$0xff]
    %v20 = vld [vmem:[%s1 + $0x18] sm:$0xff]
    %v21 = vld [vmem:[%s2] sm:$0x1]
    %v23 = vlaneseq
    %v24 = vshrl.u32 %v23, 7
    %v25 = vsub.s32 0, %v24
    %v26 = vrot.slane %v21, %v25
    %vm28 = vcmask 261120
    %v30 = vsel %vm28, %v16, 0
    %32 = vmatprep.subr.mxu0 0.0
    %33 = vmatpush1.msra.mxu0 %v17
    %34 = vmatprep.subr.mxu0 0.0
    %35 = vmatpush1.msra.mxu0 %v18
    %36 = vmatprep.subr.mxu0 0.0
    %37 = vmatpush1.msra.mxu0 %v19
    %38 = vmatprep.subr.mxu0 0.0
    %39 = vmatpush1.msra.mxu0 %v20
    %40 = vmatprep.subr.mxu0 0.0
    %41 = vmatpush1.msra.mxu0 0.0
    %42 = vmatprep.subr.mxu0 0.0
    %43 = vmatpush1.msra.mxu0 0.0
    %44 = vmatprep.subr.mxu0 0.0
    %45 = vmatpush1.msra.mxu0 0.0
    %46 = vmatprep.subr.mxu0 0.0
    %47 = vmatpush1.msra.mxu0 0.0
    %48 = vmatprep.subr.mxu0 0.0
    %49 = vmatpush1.msra.mxu0 0.0
    %50 = vmatprep.subr.mxu0 0.0
    %51 = vmatpush1.msra.mxu0 0.0
    %52 = vmatprep.subr.mxu0 0.0
    %53 = vmatpush1.msra.mxu0 0.0
    %54 = vmatprep.subr.mxu0 0.0
    %55 = vmatpush1.msra.mxu0 0.0
    %56 = vmatprep.subr.mxu0 0.0
    %57 = vmatpush1.msra.mxu0 0.0
    %58 = vmatprep.subr.mxu0 0.0
    %59 = vmatpush1.msra.mxu0 0.0
    %60 = vmatprep.subr.mxu0 0.0
    %61 = vmatpush1.msra.mxu0 0.0
    %62 = vmatprep.subr.mxu0 0.0
    %63 = vmatpush1.msra.mxu0 0.0
    %64 = vmatprep.subr.mxu0 0.0
    %65 = vmatpush1.msra.mxu0 0.0
    %66 = vmatprep.subr.mxu0 0.0
    %67 = vmatpush1.msra.mxu0 0.0
    %68 = vmatprep.subr.mxu0 0.0
    %69 = vmatpush1.msra.mxu0 0.0
    %70 = vmatprep.subr.mxu0 0.0
    %71 = vmatpush1.msra.mxu0 0.0
    %72 = vmatprep.subr.mxu0 0.0
    %73 = vmatpush1.msra.mxu0 0.0
    %74 = vmatprep.subr.mxu0 0.0
    %75 = vmatpush1.msra.mxu0 0.0
    %76 = vmatprep.subr.mxu0 0.0
    %77 = vmatpush1.msra.mxu0 0.0
    %78 = vmatprep.subr.mxu0 0.0
    %79 = vmatpush1.msra.mxu0 0.0
    %80 = vmatprep.subr.mxu0 0.0
    %81 = vmatpush1.msra.mxu0 0.0
    %82 = vmatprep.subr.mxu0 0.0
    %83 = vmatpush1.msra.mxu0 0.0
    %84 = vmatprep.subr.mxu0 0.0
    %85 = vmatpush1.msra.mxu0 0.0
    %86 = vmatprep.subr.mxu0 0.0
    %87 = vmatpush1.msra.mxu0 0.0
    %88 = vmatprep.subr.mxu0 0.0
    %89 = vmatpush1.msra.mxu0 0.0
    %90 = vmatprep.subr.mxu0 0.0
    %91 = vmatpush1.msra.mxu0 0.0
    %92 = vmatprep.subr.mxu0 0.0
    %93 = vmatpush1.msra.mxu0 0.0
    %94 = vmatprep.subr.mxu0 0.0
    %95 = vmatpush1.msra.mxu0 0.0
    %96 = vmatprep.mubr.f32.mxu0 0.0
    %97 = vmatmul.mubr.f32.gmra.mrb[0].mxu0 %v30
    %v98 = vpop.f32.mrb[0].mxu0
    %v99 = vadd.f32 %v26, %v98
    %v100 = vpop.f32.mrb[0].mxu0
    %101 = vdwg.mxu0
    %vm102 = vcmask 130048
    %103 = vst.msk [vmem:[#allocation2] sm:$0xff] %vm102, %v99
    // Predicated region
    $region14: #{tpu_custom_call.1} parent=1 // pred_check
      _
    $region15: #{tpu_custom_call.1} parent=1 // pred_check_branch
      %105 = sbr.rel (0) target = $region17
    $region16: #{tpu_custom_call.1} parent=1 // pred_region
      %s107 = ssub.s32 128, 128
      %108 = vsyncadd [#allocation3], %s107
      %s110 = sshll.u32 [#allocation2], 4
      %s111 = int_to_ptr.vmem [resolvable:$true] %s110
      %113 = dma.vmem_to_hbm [thread:$0]  %s111, 128, %s3, [#allocation3]
    $region17: #{tpu_custom_call.1} parent=1 // pred_fallthru
      _
    // Predicated region
    $region18: #{tpu_custom_call.1} parent=1 // pred_check
      _
    $region19: #{tpu_custom_call.1} parent=1 // pred_check_branch
      %115 = sbr.rel (0) target = $region21
    $region20: #{tpu_custom_call.1} parent=1 // pred_region
      %116 = dma.done [#allocation3], 128
    $region21: #{tpu_custom_call.1} parent=1 // pred_fallthru
      _
    %117 = vsyncpa [#allocation3], 1

</llo_original>
